<compile_context>
chip_gen: v7x
topology: tpu7x:2x2x1
jax: 0.10.0
libtpu: 0.0.40
codegen_flags: <defaults>
</compile_context>

<pallas_src>
import functools
import math

import jax
import jax.numpy as jnp
from jax.experimental import pallas as pl
from jax.experimental.pallas import tpu as pltpu

_MAX_BLOCK_LANES = 2048          # column-block width when tiling the last dim
_SMALL_INPUT_BYTES = 256 * 1024  # below this, skip Pallas entirely
_VMEM_LIMIT_BYTES = 32 << 20     # safe on v5e/v6e (128 MiB phys) and v7x (64 MiB phys)


def _project_ref(x: jax.Array) -> jax.Array:
    """Plain-JAX reference / small-input fast path."""
    return jnp.clip(jnp.round(x), 0.0, 5.0).astype(x.dtype)


def _project_kernel(x_ref, o_ref):
    # torch.round is round-half-to-even; jnp.round matches.
    # clip == the two torch.where clamps.
    o_ref[...] = jnp.clip(jnp.round(x_ref[...]), 0.0, 5.0).astype(o_ref.dtype)


def _round_up(a: int, b: int) -> int:
    return ((a + b - 1) // b) * b


def _row_align(dtype) -> int:
    # f32 -> 8, bf16 -> 16, int8/fp8 -> 32 (sublane packing of sub-32-bit dtypes).
    itemsize = jnp.dtype(dtype).itemsize
    return 8 * max(1, 4 // itemsize)


def _device_kind() -> str:
    try:
        return jax.devices()[0].device_kind.lower()
    except Exception:
        return ""


def _target_block_bytes(kind: str) -> int:
    if "v5" in kind:
        return 2 << 20   # v5e: modest blocks; 4 bufs x 2 MiB stays well clear
    if "v7" in kind:
        return 8 << 20   # v7x: 3.2 TB/s HBM -> bigger blocks amortize per-step cost
    return 4 << 20       # v6e and default


@jax.jit
def _project_pallas(x: jax.Array) -> jax.Array:
    orig_shape = x.shape
    dtype = x.dtype
    itemsize = jnp.dtype(dtype).itemsize

    # 2-D view.  Collapsing leading dims keeps the minor (lane) dim unchanged,
    # so this reshape is metadata-only (no relayout pass).
    if x.ndim == 1:
        n = x.shape[0]
        if n >= 1024 and n % 1024 == 0:
            x2 = x.reshape(n // 1024, 1024)
        else:
            x2 = x.reshape(1, n)
    else:
        x2 = x.reshape(-1, orig_shape[-1])
    R, C = x2.shape

    row_align = _row_align(dtype)
    kind = _device_kind()
    block_bytes = _target_block_bytes(kind)

    # Column tiling: use the full last dim when it fits (always a legal block
    # shape); otherwise 128-aligned blocks with a masked partial tail block.
    block_c = C if C <= _MAX_BLOCK_LANES else _MAX_BLOCK_LANES
    grid_c = pl.cdiv(C, block_c)

    # Row tiling: ~block_bytes per block, aligned to the packed-tile row count.
    target_rows = max(
        row_align,
        (block_bytes // (block_c * itemsize)) // row_align * row_align,
    )
    block_r = min(target_rows, _round_up(R, row_align))

    # v7x has two TensorCores: keep the grid long enough to feed both
    # (with a ~512 KiB-per-block floor so blocks never get absurdly small).
    if "v7" in kind:
        floor_rows = max(
            row_align,
            ((512 * 1024) // (block_c * itemsize)) // row_align * row_align,
        )
        cap_rows = max(floor_rows, _round_up(pl.cdiv(R, 8), row_align))
        block_r = max(row_align, min(block_r, cap_rows))
    grid_r = pl.cdiv(R, block_r)

    out2 = pl.pallas_call(
        _project_kernel,
        out_shape=jax.ShapeDtypeStruct((R, C), dtype),
        grid_spec=pltpu.PrefetchScalarGridSpec(
            num_scalar_prefetch=0,
            grid=(grid_r, grid_c),
            in_specs=[pl.BlockSpec((block_r, block_c), lambda i, j: (i, j))],
            out_specs=pl.BlockSpec((block_r, block_c), lambda i, j: (i, j)),
        ),
        compiler_params=pltpu.CompilerParams(
            dimension_semantics=("parallel", "parallel"),
            vmem_limit_bytes=_VMEM_LIMIT_BYTES,
        ),
    )(x2)

    return out2.reshape(orig_shape)


def project(fake_tensor: jax.Array, *, force_pallas: bool = False) -> jax.Array:
    """BaseGenerator.project: round then clamp to [0, 5], elementwise."""
    x = fake_tensor
    n = math.prod(x.shape) if x.shape else 1
    nbytes = n * jnp.dtype(x.dtype).itemsize
    if x.ndim == 0 or n == 0 or (not force_pallas and nbytes < _SMALL_INPUT_BYTES):
        # Small-input fast path: a fused XLA elementwise is already at roofline
        # and avoids pallas_call launch + single-step grid overhead.
        return _project_ref(x)
    return _project_pallas(x)


class BaseGeneratorPallas:
    """JAX/Pallas mirror of recad.model.attacker.aushplus.BaseGenerator."""

    def __init__(self, input_dim: int):
        self.input_dim = input_dim
        # helper tensors from the torch module (deterministic scalars)
        self.epsilon = jnp.float32(0.0001)
        self.helper_tensor = jnp.float32(2.5)

    def project(self, fake_tensor: jax.Array, *, force_pallas: bool = False) -> jax.Array:
        return project(fake_tensor, force_pallas=force_pallas)

    def forward(self, x):
        # TODO(synk): torch forward() raises NotImplementedError (abstract base).
        raise NotImplementedError


if __name__ == "__main__":
    key = jax.random.PRNGKey(0)
    k1, k2, k3 = jax.random.split(key, 3)

    gen = BaseGeneratorPallas(input_dim=128)

    # Small demo inputs consistent with the module: (batch, input_dim)-style.
    x_small = jax.random.uniform(
        k1, (8, 128), dtype=jnp.float32, minval=-2.0, maxval=7.0
    )
    # Ragged shape (not tile-aligned): exercises masked partial blocks.
    x_ragged = jax.random.uniform(
        k2, (50, 300), dtype=jnp.float32, minval=-2.0, maxval=7.0
    )
    # Higher rank: exercises the leading-dim collapse path.
    x_3d = jax.random.uniform(
        k3, (2, 4, 160), dtype=jnp.float32, minval=-2.0, maxval=7.0
    )

    # Force the Pallas path even at demo sizes so the kernel actually runs.
    out_small = jax.block_until_ready(gen.project(x_small, force_pallas=True))
    out_ragged = jax.block_until_ready(gen.project(x_ragged, force_pallas=True))
    out_3d = jax.block_until_ready(gen.project(x_3d, force_pallas=True))
    # Also check the small-input fast path agrees.
    out_fast = jax.block_until_ready(gen.project(x_small))

    ref_small = _project_ref(x_small)
    ref_ragged = _project_ref(x_ragged)
    ref_3d = _project_ref(x_3d)

    assert out_small.shape == x_small.shape
    assert out_ragged.shape == x_ragged.shape
    assert out_3d.shape == x_3d.shape
    assert jnp.allclose(out_small, ref_small), "mismatch vs reference (small)"
    assert jnp.allclose(out_ragged, ref_ragged), "mismatch vs reference (ragged)"
    assert jnp.allclose(out_3d, ref_3d), "mismatch vs reference (3d)"
    assert jnp.allclose(out_fast, ref_small), "mismatch vs reference (fast path)"

    print("KERNEL_OK")
</pallas_src>

<mosaic_0001>
module attributes {stable_mosaic.version = 11 : i64} {
  func.func @_project_kernel(%arg0: i32, %arg1: i32, %arg2: memref<8x128xf32, #tpu.memory_space<vmem>>, %arg3: memref<8x128xf32, #tpu.memory_space<vmem>>) attributes {dimension_semantics = [#tpu.dimension_semantics<parallel>, #tpu.dimension_semantics<parallel>], iteration_bounds = array<i64: 1, 1>, scalar_prefetch = 0 : i64, scratch_operands = 0 : i64, tpu.core_type = #tpu.core_type<tc>, window_params = [{transform_indices = @transform_0, window_bounds = array<i64: 8, 128>}, {transform_indices = @transform_1, window_bounds = array<i64: 8, 128>}]} {
    %c0 = arith.constant 0 : index
    %c0_0 = arith.constant 0 : index
    %0 = vector.load %arg2[%c0, %c0_0] : memref<8x128xf32, #tpu.memory_space<vmem>>, vector<8x128xf32>
    %1 = math.roundeven %0 : vector<8x128xf32>
    %cst = arith.constant 0.000000e+00 : f32
    %cst_1 = arith.constant 5.000000e+00 : f32
    %2 = vector.broadcast %cst : f32 to vector<8x128xf32>
    %3 = arith.maximumf %2, %1 : vector<8x128xf32>
    %4 = vector.broadcast %cst_1 : f32 to vector<8x128xf32>
    %5 = arith.minimumf %4, %3 : vector<8x128xf32>
    %c0_2 = arith.constant 0 : index
    %c0_3 = arith.constant 0 : index
    %6 = vector.load %arg3[%c0_2, %c0_3] : memref<8x128xf32, #tpu.memory_space<vmem>>, vector<8x128xf32>
    tpu.vector_store %arg3[%c0_2, %c0_3], %5 {strides = array<i32>} : memref<8x128xf32, #tpu.memory_space<vmem>>, vector<8x128xf32>,
    return
  }
  func.func @transform_0(%arg0: i32, %arg1: i32) -> (i32, i32) {
    %c0_i32 = arith.constant 0 : i32
    return %arg0, %arg1 : i32, i32
  }
  func.func @transform_1(%arg0: i32, %arg1: i32) -> (i32, i32) {
    %c0_i32 = arith.constant 0 : i32
    return %arg0, %arg1 : i32, i32
  }
}

</mosaic_0001>

<llo_original>
// kernel: _project_pallas.1
$region0: #{_project_pallas.1}
  #allocation0 [shape = 'u32[]', space=smem, size = 0x4, offset = 0x4, fixed_abs, tag = 'smem constant byte address 0x4 - core index']
  #allocation1 [shape = 'u32[144,128]{1,0:T(1,128)}', space=vmem, size = 0x12000, scoped, tag = 'internal scratch']
  %s0 = inlined_call_operand.hbm [shape: f32[8,128], index: 0, kind: input, shape index: {}]
  %s1 = inlined_call_operand.hbm [shape: f32[8,128], index: 1, kind: output, shape index: {}]
  %s2 = sld [smem:[#allocation0]]
  $region18: #{_project_pallas.1} parent=0
    _
  %s4 = ssub.s32 1, %s2
  %s5 = scalar_select 0, %s4, %s2
  $region1: #{_project_pallas.1} parent=0
    #allocation2 [shape = 'u8[4096]{0}', space=vmem, size = 0x1000, scoped, tag = 'input window, operand 0, single buffered']
    #allocation3 [shape = 's32[1]{0}', space=sflag, size = 0x4, scoped, tag = 'scoped memory for _project_pallas.1']
    #allocation4 [shape = 's32[1]{0}', space=sflag, size = 0x4, scoped, tag = 'scoped memory for _project_pallas.1']
    #allocation5 [shape = 'u8[4096]{0}', space=vmem, size = 0x1000, scoped, tag = 'output window, operand 0, single buffered']
    %6 = vsyncpa [#allocation3], 0
    %7 = vsyncpa [#allocation4], 0
    // Predicated region
    $region2: #{_project_pallas.1} parent=1 // pred_check
      _
    $region3: #{_project_pallas.1} parent=1 // pred_check_branch
      %9 = sbr.rel (0) target = $region5
    $region4: #{_project_pallas.1} parent=1 // pred_region
      %s11 = ssub.s32 128, 128
      %12 = vsyncadd [#allocation3], %s11
      %s14 = sshll.u32 [#allocation2], 4
      %s15 = int_to_ptr.vmem [resolvable:$true] %s14
      %17 = dma.hbm_to_vmem [thread:$0]  %s0, 128, %s15, [#allocation3]
    $region5: #{_project_pallas.1} parent=1 // pred_fallthru
      _
    // Predicated region
    $region6: #{_project_pallas.1} parent=1 // pred_check
      _
    $region7: #{_project_pallas.1} parent=1 // pred_check_branch
      %19 = sbr.rel (0) target = $region9
    $region8: #{_project_pallas.1} parent=1 // pred_region
      %20 = dma.done [#allocation3], 128
    $region9: #{_project_pallas.1} parent=1 // pred_fallthru
      _
    %v21 = vld [vmem:[#allocation2] sm:$0xff]
    %v22 = vround.ne.pseudo %v21
    %v23 = vmax.f32 %v22, 0.0
    %v24 = vmin.f32 %v23, 5.0
    %25 = vst [vmem:[#allocation5] sm:$0xff] %v24
    // Predicated region
    $region10: #{_project_pallas.1} parent=1 // pred_check
      _
    $region11: #{_project_pallas.1} parent=1 // pred_check_branch
      %27 = sbr.rel (0) target = $region13
    $region12: #{_project_pallas.1} parent=1 // pred_region
      %s29 = ssub.s32 128, 128
      %30 = vsyncadd [#allocation4], %s29
      %s32 = sshll.u32 [#allocation5], 4
      %s33 = int_to_ptr.vmem [resolvable:$true] %s32
      %35 = dma.vmem_to_hbm [thread:$0]  %s33, 128, %s1, [#allocation4]
    $region13: #{_project_pallas.1} parent=1 // pred_fallthru
      _
    // Predicated region
    $region14: #{_project_pallas.1} parent=1 // pred_check
      _
    $region15: #{_project_pallas.1} parent=1 // pred_check_branch
      %37 = sbr.rel (0) target = $region17
    $region16: #{_project_pallas.1} parent=1 // pred_region
      %38 = dma.done [#allocation4], 128
    $region17: #{_project_pallas.1} parent=1 // pred_fallthru
      _
    %39 = vsyncpa [#allocation3], 1
    %40 = vsyncpa [#allocation4], 1

</llo_original>
